<compile_context>
chip_gen: v6e
topology: v6e:2x2x1
jax: 0.10.0
libtpu: 0.0.40
codegen_flags: <defaults>
</compile_context>

<pallas_src>
import functools

import jax
import jax.numpy as jnp
from jax.experimental import pallas as pl
from jax.experimental.pallas import tpu as pltpu

_EPS = 1e-20
_LANES = 128


def _poisson_sum_jnp(pred, target):
    """Un-normalized Poisson-loss sum in plain jnp (tails / tiny inputs)."""
    p = pred.astype(jnp.float32)
    t = target.astype(jnp.float32)
    return jnp.sum(p - t * jnp.log(jnp.maximum(p, jnp.float32(_EPS))))


def _device_defaults():
    """(tile_bytes per input per buffer, num_parallel) for the local TPU."""
    kind = ""
    try:
        kind = jax.devices()[0].device_kind.lower()
    except Exception:  # pragma: no cover - defensive; defaults are safe anywhere
        pass
    big_vmem = ("v6" in kind) or ("v7" in kind)      # 32 MiB default scoped VMEM
    tile_bytes = (4 << 20) if big_vmem else (2 << 20)  # else 16 MiB default scope
    num_parallel = 2 if "v7" in kind else 1            # v7x: 2 TensorCores/chip
    return tile_bytes, num_parallel


def _poisson_loss_kernel(pred_ref, target_ref, out_ref, *,
                         rows, eff_tile, k_steps, need_mask):
    p_idx = pl.program_id(0)   # parallel axis (megacore split; size 1 off-v7x)
    k_idx = pl.program_id(1)   # reduction axis

    # Init this parallel slice's resident accumulator (its own output block).
    @pl.when(k_idx == 0)
    def _():
        out_ref[...] = jnp.zeros_like(out_ref)

    p = pred_ref[...].astype(jnp.float32)
    t = target_ref[...].astype(jnp.float32)
    val = p - t * jnp.log(jnp.maximum(p, jnp.float32(_EPS)))

    sub = eff_tile // 8  # eff_tile is always a multiple of 8

    def _accum(v):
        # (eff_tile,128) -> (sub,8,128) keeps the native (8,128) minor tiling
        # (free reshape); the axis-0 sum is pure vreg-wise VPU adds.  The final
        # sublane/lane reduce is deferred to the wrapper.
        out_ref[...] += jnp.sum(v.reshape(sub, 8, _LANES), axis=0)[None]

    if need_mask:
        # Edge tiles only: partial last row-tile and any fully-OOB tile of an
        # uneven parallel split.  Interior tiles skip the mask entirely.
        row0 = (p_idx * k_steps + k_idx) * eff_tile
        is_edge = row0 + eff_tile > rows

        @pl.when(is_edge)
        def _():
            row_ids = jax.lax.broadcasted_iota(
                jnp.int32, (eff_tile, _LANES), 0) + row0
            _accum(jnp.where(row_ids < rows, val, jnp.float32(0.0)))

        @pl.when(jnp.logical_not(is_edge))
        def _():
            _accum(val)
    else:
        _accum(val)


def poisson_loss(pred, target, *, tile_rows=None, num_parallel=None):
    """Scalar Poisson loss = mean(pred - target * log(clamp(pred, 1e-20)))."""
    assert pred.shape == target.shape, "pred/target must have identical shapes"
    n = int(pred.size)
    assert n > 0, "empty input"

    # Flatten (free, row-major); keep NATIVE dtype (cast happens in-kernel,
    # hidden under the DMA).
    p_flat = pred.reshape(-1)
    t_flat = target.reshape(-1)

    rows = n // _LANES          # full lane-aligned rows streamed by the kernel
    n_main = rows * _LANES
    inv_n = jnp.float32(1.0 / n)

    # Trivially small inputs: the kernel launch dominates; just compute in jnp.
    if rows < 8:
        return _poisson_sum_jnp(p_flat, t_flat) * inv_n

    auto_tile_bytes, auto_parallel = _device_defaults()
    if num_parallel is None:
        num_parallel = auto_parallel

    itemsize = max(int(jnp.dtype(pred.dtype).itemsize),
                   int(jnp.dtype(target.dtype).itemsize))
    if tile_rows is None:
        # Byte-targeted tile height: same VMEM footprint regardless of dtype,
        # so bf16/int8 automatically get 2x/4x taller tiles.
        tile_rows = auto_tile_bytes // (_LANES * itemsize)
    tile_rows = max(8, (int(tile_rows) // 8) * 8)

    # Main lane-aligned body (no pad; reshape is free, prefix slice only when
    # n is not a multiple of 128).  The <128-element remainder is handled with
    # a tiny jnp expression below.
    if n_main == n:
        p2 = p_flat.reshape(rows, _LANES)
        t2 = t_flat.reshape(rows, _LANES)
        tail_sum = jnp.float32(0.0)
    else:
        p2 = p_flat[:n_main].reshape(rows, _LANES)
        t2 = t_flat[:n_main].reshape(rows, _LANES)
        tail_sum = _poisson_sum_jnp(p_flat[n_main:], t_flat[n_main:])

    # Tile sizing: multiple of 8 sublanes; never larger than needed.
    eff_tile = min(tile_rows, (rows // 8) * 8)
    row_tiles = pl.cdiv(rows, eff_tile)

    # Megacore split (v7x only by default).  On small inputs an uneven split
    # just wastes a masked step, so collapse it there.
    p_eff = max(1, min(int(num_parallel), row_tiles))
    if p_eff > 1 and row_tiles % p_eff != 0 and row_tiles < 8 * p_eff:
        p_eff = 1
    k_steps = pl.cdiv(row_tiles, p_eff)
    need_mask = (rows % eff_tile != 0) or (p_eff * k_steps != row_tiles)

    def in_map(pi, ki):
        b = pi * k_steps + ki
        # Clamp fully-OOB steps of an uneven split to the previous step's block
        # index: Pallas detects the unchanged block index and elides the DMA;
        # the step itself is row-masked to zero in the kernel.
        return (jnp.minimum(b, row_tiles - 1), 0)

    kernel = functools.partial(
        _poisson_loss_kernel,
        rows=rows, eff_tile=eff_tile, k_steps=k_steps, need_mask=need_mask)

    # NOTE: 2 inputs x 2 buffers x tile fits every generation's default scoped
    # VMEM with the auto tile sizes above, so no vmem_limit_bytes is set.
    partial_sums = pl.pallas_call(
        kernel,
        out_shape=jax.ShapeDtypeStruct((p_eff, 8, _LANES), jnp.float32),
        grid_spec=pltpu.PrefetchScalarGridSpec(
            num_scalar_prefetch=0,
            grid=(p_eff, k_steps),
            in_specs=[
                pl.BlockSpec((eff_tile, _LANES), in_map),
                pl.BlockSpec((eff_tile, _LANES), in_map),
            ],
            out_specs=pl.BlockSpec((1, 8, _LANES), lambda pi, ki: (pi, 0, 0)),
        ),
        compiler_params=pltpu.CompilerParams(
            dimension_semantics=("parallel", "arbitrary"),
        ),
    )(p2, t2)

    # One tiny cross-sublane/lane reduce + 1/N scaling on (p_eff, 8, 128) f32.
    return (jnp.sum(partial_sums) + tail_sum) * inv_n


def _reference_poisson_loss(pred, target):
    p = pred.astype(jnp.float32)
    t = target.astype(jnp.float32)
    return jnp.mean(p - t * jnp.log(jnp.maximum(p, _EPS)))


if __name__ == "__main__":
    key = jax.random.PRNGKey(0)
    k1, k2, k3, k4 = jax.random.split(key, 4)

    # Small NCHW-like shape; pred is a rate (non-negative), target are counts.
    shape = (2, 4, 16, 16)
    pred = jax.nn.softplus(jax.random.normal(k1, shape, dtype=jnp.float32))
    target = jax.random.poisson(k2, lam=2.0, shape=shape).astype(jnp.float32)

    loss = jax.block_until_ready(poisson_loss(pred, target))
    ref = _reference_poisson_loss(pred, target)
    assert jnp.allclose(loss, ref, rtol=1e-5, atol=1e-6), (loss, ref)

    # Non-128-aligned shape: exercises the prefix-slice + jnp tail + edge-mask
    # path (1155 elements -> 9 aligned rows + 3-element tail, partial last tile).
    shape2 = (3, 5, 7, 11)
    pred2 = jax.nn.softplus(jax.random.normal(k3, shape2, dtype=jnp.float32))
    target2 = jax.random.poisson(k4, lam=2.0, shape=shape2).astype(jnp.float32)
    loss2 = jax.block_until_ready(poisson_loss(pred2, target2))
    ref2 = _reference_poisson_loss(pred2, target2)
    assert jnp.allclose(loss2, ref2, rtol=1e-5, atol=1e-6), (loss2, ref2)

    print("KERNEL_OK")
</pallas_src>

<mosaic_0001>
module attributes {stable_mosaic.version = 11 : i64} {
  func.func @_poisson_loss_kernel(%arg0: i32, %arg1: i32, %arg2: memref<16x128xf32, #tpu.memory_space<vmem>>, %arg3: memref<16x128xf32, #tpu.memory_space<vmem>>, %arg4: memref<1x8x128xf32, #tpu.memory_space<vmem>>) attributes {dimension_semantics = [#tpu.dimension_semantics<parallel>, #tpu.dimension_semantics<arbitrary>], iteration_bounds = array<i64: 1, 1>, scalar_prefetch = 0 : i64, scratch_operands = 0 : i64, tpu.core_type = #tpu.core_type<tc>, window_params = [{transform_indices = @transform_0, window_bounds = array<i64: 16, 128>}, {transform_indices = @transform_1, window_bounds = array<i64: 16, 128>}, {transform_indices = @transform_2, window_bounds = array<i64: 1, 8, 128>}]} {
    %c0_i32 = arith.constant 0 : i32
    %0 = arith.cmpi eq, %arg1, %c0_i32 : i32
    %1 = arith.extui %0 : i1 to i32
    %c0_i32_0 = arith.constant 0 : i32
    %2 = arith.cmpi ne, %1, %c0_i32_0 : i32
    scf.if %2 {
      %cst_11 = arith.constant 0.000000e+00 : f32
      %16 = vector.broadcast %cst_11 : f32 to vector<1x8x128xf32>
      %c0_12 = arith.constant 0 : index
      %c0_13 = arith.constant 0 : index
      %c0_14 = arith.constant 0 : index
      %17 = vector.load %arg4[%c0_12, %c0_13, %c0_14] : memref<1x8x128xf32, #tpu.memory_space<vmem>>, vector<1x8x128xf32>
      tpu.vector_store %arg4[%c0_12, %c0_13, %c0_14], %16 {strides = array<i32>} : memref<1x8x128xf32, #tpu.memory_space<vmem>>, vector<1x8x128xf32>,
    } else {
    }
    %c0 = arith.constant 0 : index
    %c0_1 = arith.constant 0 : index
    %3 = vector.load %arg2[%c0, %c0_1] : memref<16x128xf32, #tpu.memory_space<vmem>>, vector<16x128xf32>
    %c0_2 = arith.constant 0 : index
    %c0_3 = arith.constant 0 : index
    %4 = vector.load %arg3[%c0_2, %c0_3] : memref<16x128xf32, #tpu.memory_space<vmem>>, vector<16x128xf32>
    %cst = arith.constant 9.99999968E-21 : f32
    %5 = vector.broadcast %cst : f32 to vector<16x128xf32>
    %6 = arith.maximumf %3, %5 : vector<16x128xf32>
    %7 = math.log %6 : vector<16x128xf32>
    %8 = arith.mulf %4, %7 : vector<16x128xf32>
    %9 = arith.subf %3, %8 : vector<16x128xf32>
    %c0_4 = arith.constant 0 : index
    %c0_5 = arith.constant 0 : index
    %c0_6 = arith.constant 0 : index
    %10 = vector.load %arg4[%c0_4, %c0_5, %c0_6] : memref<1x8x128xf32, #tpu.memory_space<vmem>>, vector<1x8x128xf32>
    %11 = vector.shape_cast %9 : vector<16x128xf32> to vector<2x8x128xf32>
    %cst_7 = arith.constant dense<0.000000e+00> : vector<8x128xf32>
    %12 = vector.multi_reduction <add>, %11, %cst_7 [0] : vector<2x8x128xf32> to vector<8x128xf32>
    %13 = vector.shape_cast %12 : vector<8x128xf32> to vector<1x8x128xf32>
    %14 = arith.addf %10, %13 : vector<1x8x128xf32>
    %c0_8 = arith.constant 0 : index
    %c0_9 = arith.constant 0 : index
    %c0_10 = arith.constant 0 : index
    %15 = vector.load %arg4[%c0_8, %c0_9, %c0_10] : memref<1x8x128xf32, #tpu.memory_space<vmem>>, vector<1x8x128xf32>
    tpu.vector_store %arg4[%c0_8, %c0_9, %c0_10], %14 {strides = array<i32>} : memref<1x8x128xf32, #tpu.memory_space<vmem>>, vector<1x8x128xf32>,
    return
  }
  func.func @transform_0(%arg0: i32, %arg1: i32) -> (i32, i32) {
    %c1_i32 = arith.constant 1 : i32
    %0 = arith.muli %arg0, %c1_i32 : i32
    %1 = arith.addi %0, %arg1 : i32
    %c0_i32 = arith.constant 0 : i32
    %2 = arith.minsi %1, %c0_i32 : i32
    %c0_i32_0 = arith.constant 0 : i32
    %c0_i32_1 = arith.constant 0 : i32
    return %2, %c0_i32_0 : i32, i32
  }
  func.func @transform_1(%arg0: i32, %arg1: i32) -> (i32, i32) {
    %c1_i32 = arith.constant 1 : i32
    %0 = arith.muli %arg0, %c1_i32 : i32
    %1 = arith.addi %0, %arg1 : i32
    %c0_i32 = arith.constant 0 : i32
    %2 = arith.minsi %1, %c0_i32 : i32
    %c0_i32_0 = arith.constant 0 : i32
    %c0_i32_1 = arith.constant 0 : i32
    return %2, %c0_i32_0 : i32, i32
  }
  func.func @transform_2(%arg0: i32, %arg1: i32) -> (i32, i32, i32) {
    %c0_i32 = arith.constant 0 : i32
    %c0_i32_0 = arith.constant 0 : i32
    %c0_i32_1 = arith.constant 0 : i32
    return %arg0, %c0_i32, %c0_i32_0 : i32, i32, i32
  }
}

</mosaic_0001>

<llo_original>
// kernel: tpu_custom_call.1
$region0: #{tpu_custom_call.1}
  #allocation0 [shape = 'u32[]', space=smem, size = 0x4, offset = 0x4, fixed_abs, tag = 'smem constant byte address 0x4 - core index']
  #allocation1 [shape = 'u32[144,128]{1,0:T(1,128)}', space=vmem, size = 0x12000, scoped, tag = 'internal scratch']
  %s0 = inlined_call_operand.hbm [shape: f32[16,128], index: 0, kind: input, shape index: {}]
  %s1 = inlined_call_operand.hbm [shape: f32[16,128], index: 1, kind: input, shape index: {}]
  %s2 = inlined_call_operand.hbm [shape: f32[1,8,128], index: 2, kind: output, shape index: {}]
  %s3 = sld [smem:[#allocation0]]
  $region30: #{tpu_custom_call.1} parent=0
    _
  %s5 = ssub.s32 1, %s3
  %s6 = scalar_select 0, %s5, %s3
  $region1: #{tpu_custom_call.1} parent=0
    #allocation2 [shape = 'u8[8192]{0}', space=vmem, size = 0x2000, scoped, tag = 'input window, operand 0, single buffered']
    #allocation3 [shape = 's32[1]{0}', space=sflag, size = 0x4, scoped, tag = 'scoped memory for tpu_custom_call.1']
    #allocation4 [shape = 's32[1]{0}', space=sflag, size = 0x4, scoped, tag = 'scoped memory for tpu_custom_call.1']
    #allocation5 [shape = 'u8[8192]{0}', space=vmem, size = 0x2000, scoped, tag = 'input window, operand 1, single buffered']
    #allocation6 [shape = 's32[1]{0}', space=sflag, size = 0x4, scoped, tag = 'scoped memory for tpu_custom_call.1']
    #allocation7 [shape = 'u8[4096]{0}', space=vmem, size = 0x1000, scoped, tag = 'output window, operand 0, single buffered']
    %7 = vsyncpa [#allocation3], 0
    %8 = vsyncpa [#allocation6], 0
    %9 = vsyncpa [#allocation4], 0
    // Predicated region
    $region2: #{tpu_custom_call.1} parent=1 // pred_check
      _
    $region3: #{tpu_custom_call.1} parent=1 // pred_check_branch
      %11 = sbr.rel (0) target = $region5
    $region4: #{tpu_custom_call.1} parent=1 // pred_region
      %s12 = sadd.s32 0, 0
      %p13 = scmp.lt.s32.totalorder %s12, 0
      %s14 = scalar_select %p13, %s12, 0
      %s15 = smul.u32 2, %s14
      %s17 = ssub.s32 256, 256
      %18 = vsyncadd [#allocation3], %s17
      %s19 = smul.addr %s15, 128
      %s20 = scalar_lea.hbm %s0, %s19
      %s21 = sshll.u32 [#allocation2], 4
      %s22 = int_to_ptr.vmem [resolvable:$true] %s21
      %27 = dma.hbm_to_vmem [thread:$0]  %s20, 256, %s22, [#allocation3], 128, 128, 8
    $region5: #{tpu_custom_call.1} parent=1 // pred_fallthru
      _
    // Predicated region
    $region6: #{tpu_custom_call.1} parent=1 // pred_check
      _
    $region7: #{tpu_custom_call.1} parent=1 // pred_check_branch
      %29 = sbr.rel (0) target = $region9
    $region8: #{tpu_custom_call.1} parent=1 // pred_region
      %s30 = sadd.s32 0, 0
      %p31 = scmp.lt.s32.totalorder %s30, 0
      %s32 = scalar_select %p31, %s30, 0
      %s33 = smul.u32 2, %s32
      %s35 = ssub.s32 256, 256
      %36 = vsyncadd [#allocation6], %s35
      %s37 = smul.addr %s33, 128
      %s38 = scalar_lea.hbm %s1, %s37
      %s39 = sshll.u32 [#allocation5], 4
      %s40 = int_to_ptr.vmem [resolvable:$true] %s39
      %45 = dma.hbm_to_vmem [thread:$0]  %s38, 256, %s40, [#allocation6], 128, 128, 8
    $region9: #{tpu_custom_call.1} parent=1 // pred_fallthru
      _
    // Predicated region
    $region10: #{tpu_custom_call.1} parent=1 // pred_check
      _
    $region11: #{tpu_custom_call.1} parent=1 // pred_check_branch
      %47 = sbr.rel (0) target = $region13
    $region12: #{tpu_custom_call.1} parent=1 // pred_region
      %48 = dma.done [#allocation3], 256
    $region13: #{tpu_custom_call.1} parent=1 // pred_fallthru
      _
    // Predicated region
    $region14: #{tpu_custom_call.1} parent=1 // pred_check
      _
    $region15: #{tpu_custom_call.1} parent=1 // pred_check_branch
      %50 = sbr.rel (0) target = $region17
    $region16: #{tpu_custom_call.1} parent=1 // pred_region
      %51 = dma.done [#allocation6], 256
    $region17: #{tpu_custom_call.1} parent=1 // pred_fallthru
      _
    %s52 = sadd.s32 0, 0
    %p53 = scmp.lt.s32.totalorder %s52, 0
    %s54 = scalar_select %p53, %s52, 0
    %s55 = smul.u32 2, %s54
    %s56 = sadd.s32 0, 0
    %p57 = scmp.lt.s32.totalorder %s56, 0
    %s58 = scalar_select %p57, %s56, 0
    %s59 = smul.u32 2, %s58
    %p60 = scmp.eq.s32.totalorder 0, 0
    // Predicated region
    $region18: #{tpu_custom_call.1} parent=1 // pred_check
      %p61 = pneg %p60
    $region19: #{tpu_custom_call.1} parent=1 // pred_check_branch
      %63 = sbr.rel (%p61) target = $region21
    $region20: #{tpu_custom_call.1} parent=1 // pred_region
      %64 = vst [vmem:[#allocation7] sm:$0xff] 0.0
    $region21: #{tpu_custom_call.1} parent=1 // pred_fallthru
      _
    %v65 = vld [vmem:[#allocation2] sm:$0xff]
    %v66 = vld [vmem:[#allocation2 + $0x8] sm:$0xff]
    %v67 = vld [vmem:[#allocation5] sm:$0xff]
    %v68 = vld [vmem:[#allocation5 + $0x8] sm:$0xff]
    %v69 = vmax.f32 %v65, 1e-20
    %v70 = vmax.f32 %v66, 1e-20
    %v71 = vlog2.pop %v69
    %v72 = vmul.f32 %v71, 0.6931472
    %v73 = vlog2.pop %v70
    %v74 = vmul.f32 %v73, 0.6931472
    %v75 = vmul.f32 %v67, %v72
    %v76 = vmul.f32 %v68, %v74
    %v77 = vsub.f32 %v65, %v75
    %v78 = vsub.f32 %v66, %v76
    %v79 = vld [vmem:[#allocation7] sm:$0xff]
    %v80 = vadd.f32 %v77, %v78
    %v81 = vadd.f32 %v79, %v80
    %82 = vst [vmem:[#allocation7] sm:$0xff] %v81
    // Predicated region
    $region22: #{tpu_custom_call.1} parent=1 // pred_check
      _
    $region23: #{tpu_custom_call.1} parent=1 // pred_check_branch
      %84 = sbr.rel (0) target = $region25
    $region24: #{tpu_custom_call.1} parent=1 // pred_region
      %s86 = ssub.s32 128, 128
      %87 = vsyncadd [#allocation4], %s86
      %s89 = sshll.u32 [#allocation7], 4
      %s90 = int_to_ptr.vmem [resolvable:$true] %s89
      %92 = dma.vmem_to_hbm [thread:$0]  %s90, 128, %s2, [#allocation4]
    $region25: #{tpu_custom_call.1} parent=1 // pred_fallthru
      _
    // Predicated region
    $region26: #{tpu_custom_call.1} parent=1 // pred_check
      _
    $region27: #{tpu_custom_call.1} parent=1 // pred_check_branch
      %94 = sbr.rel (0) target = $region29
    $region28: #{tpu_custom_call.1} parent=1 // pred_region
      %95 = dma.done [#allocation4], 128
    $region29: #{tpu_custom_call.1} parent=1 // pred_fallthru
      _
    %96 = vsyncpa [#allocation3], 1
    %97 = vsyncpa [#allocation6], 1
    %98 = vsyncpa [#allocation4], 1

</llo_original>
